<compile_context>
chip_gen: v7x
topology: tpu7x:2x2x1
jax: 0.10.0
libtpu: 0.0.40
codegen_flags: <defaults>
</compile_context>

<pallas_src>
import functools

import jax
import jax.numpy as jnp
from jax.experimental import pallas as pl
from jax.experimental.pallas import tpu as pltpu


C_IN = 256  # fixed by the module (Conv1d(256, 256, 1))


def _round_up(x, m):
    return (x + m - 1) // m * m


def _cdiv(a, b):
    return -(-a // b)


def _swad_kernel(x_ref, w1_ref, b1_ref, w2_ref, b2_ref, out_ref):
    # x_ref:  (1, 256, tn)   f32   seed-feature slab (channels x seeds)
    # w1_ref: (256, 256)     bf16  conv1 weights, torch layout (out, in)
    # b1_ref: (256, 1)       f32
    # w2_ref: (Cp, 256)      bf16  conv_swad weights (out, in), Cp = pad(2*A*D, 8)
    # b2_ref: (Cp, 1)        f32
    # out_ref:(1, Cp, tn)    bf16
    x = x_ref[0].astype(jnp.bfloat16)                              # cast on VPU, hidden under MXU
    h = jnp.dot(w1_ref[...], x, preferred_element_type=jnp.float32)
    h = jnp.maximum(h + b1_ref[...], 0.0)                          # bias + ReLU in f32
    y = jnp.dot(w2_ref[...], h.astype(jnp.bfloat16),
                preferred_element_type=jnp.float32) + b2_ref[...]
    out_ref[0] = y.astype(out_ref.dtype)


@functools.partial(jax.jit, static_argnames=("num_angle", "num_depth", "tn"))
def swad_forward(vp_features, w1, b1, w2, b2, *, num_angle, num_depth, tn=1024):
    """SWADNet forward.

    vp_features: (B, 256, num_seed) float32 (or bf16)
    w1: (256, 256)   torch layout (out, in);  b1: (256,)
    w2: (2*A*D, 256) torch layout (out, in);  b2: (2*A*D,)
    Returns (grasp_score_pred, grasp_width_pred), each (B, num_seed, A, D) float32.
    """
    B, C, N = vp_features.shape
    assert C == C_IN
    c_out = 2 * num_angle * num_depth
    c_out_p = _round_up(c_out, 8)          # sublane-aligned output channels

    # Seed tile: multiple of 128 lanes (or the full seed dim when N < 128),
    # never exceeding N so no wrapper-side padding of the input is needed.
    if N < 128:
        tn_eff = N
    else:
        tn_eff = min(tn, (N // 128) * 128)
        # v7x: make sure the grid has >= 2 "parallel" steps so both TCs work.
        if B * _cdiv(N, tn_eff) < 2 and tn_eff > 128:
            tn_eff = max(128, _round_up(tn_eff // 2, 128))
    n_tiles = _cdiv(N, tn_eff)

    # Parameter prep (tiny arrays, folded into the jit):
    w1_b = w1.astype(jnp.bfloat16)
    b1_c = b1.reshape(C_IN, 1).astype(jnp.float32)
    w2_f, b2_f = w2, b2
    if c_out_p != c_out:
        w2_f = jnp.pad(w2_f, ((0, c_out_p - c_out), (0, 0)))
        b2_f = jnp.pad(b2_f, ((0, c_out_p - c_out),))
    w2_b = w2_f.astype(jnp.bfloat16)
    b2_c = b2_f.reshape(c_out_p, 1).astype(jnp.float32)

    in_bytes = int(jnp.dtype(vp_features.dtype).itemsize)
    cost = pl.CostEstimate(
        flops=2 * B * N * C_IN * (C_IN + c_out_p),
        transcendentals=0,
        bytes_accessed=(B * C_IN * N * in_bytes            # input read
                        + B * c_out_p * N * 2              # bf16 output write
                        + (C_IN * C_IN + c_out_p * C_IN) * 2
                        + (C_IN + c_out_p) * 4))

    out = pl.pallas_call(
        _swad_kernel,
        out_shape=jax.ShapeDtypeStruct((B, c_out_p, N), jnp.bfloat16),
        grid_spec=pltpu.PrefetchScalarGridSpec(
            num_scalar_prefetch=0,
            grid=(B, n_tiles),
            in_specs=[
                pl.BlockSpec((1, C_IN, tn_eff), lambda b, j: (b, 0, j)),  # x slab
                pl.BlockSpec((C_IN, C_IN), lambda b, j: (0, 0)),          # W1 (resident)
                pl.BlockSpec((C_IN, 1), lambda b, j: (0, 0)),             # b1
                pl.BlockSpec((c_out_p, C_IN), lambda b, j: (0, 0)),       # W2 (resident)
                pl.BlockSpec((c_out_p, 1), lambda b, j: (0, 0)),          # b2
            ],
            out_specs=pl.BlockSpec((1, c_out_p, tn_eff), lambda b, j: (b, 0, j)),
        ),
        compiler_params=pltpu.CompilerParams(
            dimension_semantics=("parallel", "parallel")),
        cost_estimate=cost,
    )(vp_features, w1_b, b1_c, w2_b, b2_c)

    # (B, Cp, N) bf16 -> (B, 2*A*D, N) -> (B, 2, A, D, N) -> (B, 2, N, A, D) f32.
    # Slice only when channel padding was actually added; the permute runs on
    # bf16 and the f32 convert is fused into it.
    # TODO(synk): downstream consumers that can take NCW could skip this permute
    # entirely and view out[:, :A*D] / out[:, A*D:2*A*D] directly.
    if c_out_p != c_out:
        out = out[:, :c_out, :]
    out = out.reshape(B, 2, num_angle, num_depth, N).transpose(0, 1, 4, 2, 3)
    out = out.astype(jnp.float32)
    grasp_score_pred = out[:, 0]   # (B, N, A, D)
    grasp_width_pred = out[:, 1]   # (B, N, A, D)
    return grasp_score_pred, grasp_width_pred


def _reference(vp_features, w1, b1, w2, b2, num_angle, num_depth):
    """Pure-JAX f32 reference mirroring the PyTorch module (torch-layout W)."""
    B, C, N = vp_features.shape
    h = jnp.einsum("oi,bin->bon", w1, vp_features) + b1.reshape(1, -1, 1)
    h = jnp.maximum(h, 0.0)
    y = jnp.einsum("oi,bin->bon", w2, h) + b2.reshape(1, -1, 1)
    y = y.reshape(B, 2, num_angle, num_depth, N).transpose(0, 1, 4, 2, 3)
    return y[:, 0], y[:, 1]


if __name__ == "__main__":
    num_angle, num_depth = 12, 4       # GraspNet defaults
    B, N = 2, 8                        # small batch / seed count for the test
    c_out = 2 * num_angle * num_depth  # 96

    key = jax.random.PRNGKey(0)
    k_x, k_w1, k_b1, k_w2, k_b2 = jax.random.split(key, 5)

    vp_features = jax.random.normal(k_x, (B, C_IN, N), dtype=jnp.float32)
    # Torch-layout parameters: W (out, in), b (out,)
    w1 = jax.random.normal(k_w1, (C_IN, C_IN), dtype=jnp.float32) * 0.05
    b1 = jax.random.normal(k_b1, (C_IN,), dtype=jnp.float32) * 0.05
    w2 = jax.random.normal(k_w2, (c_out, C_IN), dtype=jnp.float32) * 0.05
    b2 = jax.random.normal(k_b2, (c_out,), dtype=jnp.float32) * 0.05

    score, width = swad_forward(vp_features, w1, b1, w2, b2,
                                num_angle=num_angle, num_depth=num_depth)
    jax.block_until_ready((score, width))

    ref_score, ref_width = _reference(vp_features, w1, b1, w2, b2,
                                      num_angle, num_depth)
    assert score.shape == (B, N, num_angle, num_depth)
    assert width.shape == (B, N, num_angle, num_depth)
    # bf16 matmuls / bf16 kernel output vs f32 reference -> loosened tolerance.
    assert jnp.allclose(score, ref_score, atol=3e-2, rtol=3e-2)
    assert jnp.allclose(width, ref_width, atol=3e-2, rtol=3e-2)

    print("KERNEL_OK")
</pallas_src>

<mosaic_0001>
module attributes {stable_mosaic.version = 11 : i64} {
  func.func @_swad_kernel(%arg0: i32, %arg1: i32, %arg2: memref<1x256x8xf32, #tpu.memory_space<vmem>>, %arg3: memref<256x256xbf16, #tpu.memory_space<vmem>>, %arg4: memref<256x1xf32, #tpu.memory_space<vmem>>, %arg5: memref<96x256xbf16, #tpu.memory_space<vmem>>, %arg6: memref<96x1xf32, #tpu.memory_space<vmem>>, %arg7: memref<1x96x8xbf16, #tpu.memory_space<vmem>>) attributes {dimension_semantics = [#tpu.dimension_semantics<parallel>, #tpu.dimension_semantics<parallel>], iteration_bounds = array<i64: 2, 1>, scalar_prefetch = 0 : i64, scratch_operands = 0 : i64, tpu.core_type = #tpu.core_type<tc>, window_params = [{transform_indices = @transform_0, window_bounds = array<i64: 1, 256, 8>}, {pipeline_mode = #tpu.pipeline_mode<synchronous>, transform_indices = @transform_1, window_bounds = array<i64: 256, 256>}, {pipeline_mode = #tpu.pipeline_mode<synchronous>, transform_indices = @transform_2, window_bounds = array<i64: 256, 1>}, {pipeline_mode = #tpu.pipeline_mode<synchronous>, transform_indices = @transform_3, window_bounds = array<i64: 96, 256>}, {pipeline_mode = #tpu.pipeline_mode<synchronous>, transform_indices = @transform_4, window_bounds = array<i64: 96, 1>}, {transform_indices = @transform_5, window_bounds = array<i64: 1, 96, 8>}]} {
    %c0 = arith.constant 0 : index
    %c0_0 = arith.constant 0 : index
    %c0_1 = arith.constant 0 : index
    %0 = vector.load %arg2[%c0, %c0_0, %c0_1] : memref<1x256x8xf32, #tpu.memory_space<vmem>>, vector<1x256x8xf32>
    %1 = vector.shape_cast %0 : vector<1x256x8xf32> to vector<256x8xf32>
    %2 = arith.truncf %1 : vector<256x8xf32> to vector<256x8xbf16>
    %c0_2 = arith.constant 0 : index
    %c0_3 = arith.constant 0 : index
    %3 = vector.load %arg3[%c0_2, %c0_3] : memref<256x256xbf16, #tpu.memory_space<vmem>>, vector<256x256xbf16>
    %cst = arith.constant dense<0.000000e+00> : vector<256x8xf32>
    %4 = tpu.matmul %3, %2, %cst {dimension_numbers = #tpu.dot_dimension_numbers<[1], [0], [0], [1], [0, 0, 1, 1], [], []>} : vector<256x256xbf16>, vector<256x8xbf16>, vector<256x8xf32> -> vector<256x8xf32>
    %c0_4 = arith.constant 0 : index
    %c0_5 = arith.constant 0 : index
    %5 = vector.load %arg4[%c0_4, %c0_5] : memref<256x1xf32, #tpu.memory_space<vmem>>, vector<256x1xf32>
    %6 = vector.broadcast %5 : vector<256x1xf32> to vector<256x8xf32>
    %7 = arith.addf %4, %6 : vector<256x8xf32>
    %cst_6 = arith.constant 0.000000e+00 : f32
    %8 = vector.broadcast %cst_6 : f32 to vector<256x8xf32>
    %9 = arith.maximumf %7, %8 : vector<256x8xf32>
    %c0_7 = arith.constant 0 : index
    %c0_8 = arith.constant 0 : index
    %10 = vector.load %arg5[%c0_7, %c0_8] : memref<96x256xbf16, #tpu.memory_space<vmem>>, vector<96x256xbf16>
    %11 = arith.truncf %9 : vector<256x8xf32> to vector<256x8xbf16>
    %cst_9 = arith.constant dense<0.000000e+00> : vector<96x8xf32>
    %12 = tpu.matmul %10, %11, %cst_9 {dimension_numbers = #tpu.dot_dimension_numbers<[1], [0], [0], [1], [0, 0, 1, 1], [], []>} : vector<96x256xbf16>, vector<256x8xbf16>, vector<96x8xf32> -> vector<96x8xf32>
    %c0_10 = arith.constant 0 : index
    %c0_11 = arith.constant 0 : index
    %13 = vector.load %arg6[%c0_10, %c0_11] : memref<96x1xf32, #tpu.memory_space<vmem>>, vector<96x1xf32>
    %14 = vector.broadcast %13 : vector<96x1xf32> to vector<96x8xf32>
    %15 = arith.addf %12, %14 : vector<96x8xf32>
    %16 = arith.truncf %15 : vector<96x8xf32> to vector<96x8xbf16>
    %c0_12 = arith.constant 0 : index
    %c0_13 = arith.constant 0 : index
    %c0_14 = arith.constant 0 : index
    %17 = vector.load %arg7[%c0_12, %c0_13, %c0_14] : memref<1x96x8xbf16, #tpu.memory_space<vmem>>, vector<1x96x8xbf16>
    %18 = vector.shape_cast %17 : vector<1x96x8xbf16> to vector<96x8xbf16>
    %19 = vector.shape_cast %16 : vector<96x8xbf16> to vector<1x96x8xbf16>
    tpu.vector_store %arg7[%c0_12, %c0_13, %c0_14], %19 {strides = array<i32>} : memref<1x96x8xbf16, #tpu.memory_space<vmem>>, vector<1x96x8xbf16>,
    return
  }
  func.func @transform_0(%arg0: i32, %arg1: i32) -> (i32, i32, i32) {
    %c0_i32 = arith.constant 0 : i32
    %c0_i32_0 = arith.constant 0 : i32
    return %arg0, %c0_i32, %arg1 : i32, i32, i32
  }
  func.func @transform_1(%arg0: i32, %arg1: i32) -> (i32, i32) {
    %c0_i32 = arith.constant 0 : i32
    %c0_i32_0 = arith.constant 0 : i32
    %c0_i32_1 = arith.constant 0 : i32
    return %c0_i32, %c0_i32_0 : i32, i32
  }
  func.func @transform_2(%arg0: i32, %arg1: i32) -> (i32, i32) {
    %c0_i32 = arith.constant 0 : i32
    %c0_i32_0 = arith.constant 0 : i32
    %c0_i32_1 = arith.constant 0 : i32
    return %c0_i32, %c0_i32_0 : i32, i32
  }
  func.func @transform_3(%arg0: i32, %arg1: i32) -> (i32, i32) {
    %c0_i32 = arith.constant 0 : i32
    %c0_i32_0 = arith.constant 0 : i32
    %c0_i32_1 = arith.constant 0 : i32
    return %c0_i32, %c0_i32_0 : i32, i32
  }
  func.func @transform_4(%arg0: i32, %arg1: i32) -> (i32, i32) {
    %c0_i32 = arith.constant 0 : i32
    %c0_i32_0 = arith.constant 0 : i32
    %c0_i32_1 = arith.constant 0 : i32
    return %c0_i32, %c0_i32_0 : i32, i32
  }
  func.func @transform_5(%arg0: i32, %arg1: i32) -> (i32, i32, i32) {
    %c0_i32 = arith.constant 0 : i32
    %c0_i32_0 = arith.constant 0 : i32
    return %arg0, %c0_i32, %arg1 : i32, i32, i32
  }
}

</mosaic_0001>

<llo_original>
// kernel: swad_forward.1
$region0: #{swad_forward.1}
  #allocation0 [shape = 'u32[]', space=smem, size = 0x4, offset = 0x4, fixed_abs, tag = 'smem constant byte address 0x4 - core index']
  #allocation1 [shape = 'u32[144,128]{1,0:T(1,128)}', space=vmem, size = 0x12000, scoped, tag = 'internal scratch']
  %s0 = inlined_call_operand.vmem [shape: f32[2,256,8], index: 0, kind: input, shape index: {}]
  %s1 = inlined_call_operand.vmem [shape: bf16[256,256], index: 1, kind: input, shape index: {}]
  %s2 = inlined_call_operand.vmem [shape: f32[256,1], index: 2, kind: input, shape index: {}]
  %s3 = inlined_call_operand.vmem [shape: bf16[96,256], index: 3, kind: input, shape index: {}]
  %s4 = inlined_call_operand.vmem [shape: f32[96,1], index: 4, kind: input, shape index: {}]
  %s5 = inlined_call_operand.vmem [shape: bf16[2,96,8], index: 5, kind: output, shape index: {}]
  %s6 = sld [smem:[#allocation0]]
  $region53: #{swad_forward.1} parent=0
    _
  %s8 = ssub.s32 1, %s6
  %s9 = scalar_select 0, %s8, %s6
  loop: start=0, step=1, limit=4
  $region2: #{swad_forward.1} parent=0 // loop_pre_header
    _
  $region3: #{swad_forward.1} parent=0 // loop_header
    %s11 = sphi 0, %s15
    %p12 = scmp.ge.s32.totalorder %s11, 4
    %s18 = sphi 0, %s30
    %s19 = sphi 0, %s26
    %s20 = sphi 0, %s18
    %s21 = sphi 0, %s19
    %s22 = sphi 0, %s20
    %s23 = sphi 0, %s21
    %s35 = sphi 0, %s37
    %s38 = sphi 0, %s35
    %s39 = sphi 0, %s38
    %s55 = sphi 0, %s39
    %s59 = sphi 0, %s59
    %s61 = sphi 0, %s59
    %s62 = sphi 0, %s61
    %s76 = sphi 0, %s62
    %s80 = sphi 0, %s80
    %s82 = sphi 0, %s80
    %s83 = sphi 0, %s82
    %s97 = sphi 0, %s83
    %s101 = sphi 0, %s101
    %s103 = sphi 0, %s101
    %s104 = sphi 0, %s103
    %s118 = sphi 0, %s104
    %s122 = sphi 0, %s122
    %s124 = sphi 0, %s122
    %s125 = sphi 0, %s124
    %s139 = sphi 0, %s125
    %s147 = sphi 0, %s149
    %s150 = sphi 0, %s147
    %s151 = sphi 0, %s150
    %s167 = sphi 0, %s151
  $region4: #{swad_forward.1} parent=0 // loop_header_branch
    %14 = sbr.rel (%p12) target = $region8
  $region5: #{swad_forward.1} parent=0 // loop_body
    %s16 = ssub.s32 %s11, 1
    %s17 = ssub.s32 %s11, 2
    %s24 = sadd.s32 1, %s19
    %p25 = scmp.ge.s32.totalorder %s24, 1
    %s26 = scalar_select %p25, 0, %s24
    %s27 = sadd.s32 1, %s18
    %s28 = scalar_select %p25, %s27, %s18
    %p29 = scmp.ge.s32.totalorder %s28, 2
    %s30 = scalar_select %p29, 0, %s28
    %s31 = ssub.s32 %s18, %s30
    %s32 = ssub.s32 %s19, %s26
    %s33 = sor.u32 %s31, %s32
    %p34 = scmp.eq.s32.totalorder %s33, 0
    %s36 = sadd.s32 %s35, 1
    %s37 = scalar_select %p34, %s35, %s36
    %p40 = pneg %p34
    %p41 = scmp.eq.s32.totalorder %s11, 1
    %p42 = por %p40, %p41
    %p43 = scmp.ne.s32.totalorder %s35, %s38
    %p44 = scmp.eq.s32.totalorder %s11, 0
    %p45 = por %p43, %p44
    %p46 = scmp.ne.s32.totalorder %s35, %s38
    %p47 = scmp.eq.s32.totalorder %s16, 1
    %p48 = por %p46, %p47
    %p49 = scmp.ne.s32.totalorder %s38, %s39
    %p50 = scmp.eq.s32.totalorder %s16, 0
    %p51 = por %p49, %p50
    %p52 = scmp.ne.s32.totalorder %s38, %s39
    %p53 = scmp.eq.s32.totalorder %s17, 1
    %p54 = por %p52, %p53
    %p56 = scmp.ne.s32.totalorder %s39, %s55
    %p57 = scmp.eq.s32.totalorder %s17, 0
    %p58 = por %p56, %p57
    %s60 = sadd.s32 %s59, 1
    %p63 = scmp.eq.s32.totalorder %s11, 1
    %p64 = scmp.ne.s32.totalorder %s59, %s61
    %p65 = scmp.eq.s32.totalorder %s11, 0
    %p66 = por %p64, %p65
    %p67 = scmp.ne.s32.totalorder %s59, %s61
    %p68 = scmp.eq.s32.totalorder %s16, 1
    %p69 = por %p67, %p68
    %p70 = scmp.ne.s32.totalorder %s61, %s62
    %p71 = scmp.eq.s32.totalorder %s16, 0
    %p72 = por %p70, %p71
    %p73 = scmp.ne.s32.totalorder %s61, %s62
    %p74 = scmp.eq.s32.totalorder %s17, 1
    %p75 = por %p73, %p74
    %p77 = scmp.ne.s32.totalorder %s62, %s76
    %p78 = scmp.eq.s32.totalorder %s17, 0
    %p79 = por %p77, %p78
    %s81 = sadd.s32 %s80, 1
    %p84 = scmp.eq.s32.totalorder %s11, 1
    %p85 = scmp.ne.s32.totalorder %s80, %s82
    %p86 = scmp.eq.s32.totalorder %s11, 0
    %p87 = por %p85, %p86
    %p88 = scmp.ne.s32.totalorder %s80, %s82
    %p89 = scmp.eq.s32.totalorder %s16, 1
    %p90 = por %p88, %p89
    %p91 = scmp.ne.s32.totalorder %s82, %s83
    %p92 = scmp.eq.s32.totalorder %s16, 0
    %p93 = por %p91, %p92
    %p94 = scmp.ne.s32.totalorder %s82, %s83
    %p95 = scmp.eq.s32.totalorder %s17, 1
    %p96 = por %p94, %p95
    %p98 = scmp.ne.s32.totalorder %s83, %s97
    %p99 = scmp.eq.s32.totalorder %s17, 0
    %p100 = por %p98, %p99
    %s102 = sadd.s32 %s101, 1
    %p105 = scmp.eq.s32.totalorder %s11, 1
    %p106 = scmp.ne.s32.totalorder %s101, %s103
    %p107 = scmp.eq.s32.totalorder %s11, 0
    %p108 = por %p106, %p107
    %p109 = scmp.ne.s32.totalorder %s101, %s103
    %p110 = scmp.eq.s32.totalorder %s16, 1
    %p111 = por %p109, %p110
    %p112 = scmp.ne.s32.totalorder %s103, %s104
    %p113 = scmp.eq.s32.totalorder %s16, 0
    %p114 = por %p112, %p113
    %p115 = scmp.ne.s32.totalorder %s103, %s104
    %p116 = scmp.eq.s32.totalorder %s17, 1
    %p117 = por %p115, %p116
    %p119 = scmp.ne.s32.totalorder %s104, %s118
    %p120 = scmp.eq.s32.totalorder %s17, 0
    %p121 = por %p119, %p120
    %s123 = sadd.s32 %s122, 1
    %p126 = scmp.eq.s32.totalorder %s11, 1
    %p127 = scmp.ne.s32.totalorder %s122, %s124
    %p128 = scmp.eq.s32.totalorder %s11, 0
    %p129 = por %p127, %p128
    %p130 = scmp.ne.s32.totalorder %s122, %s124
    %p131 = scmp.eq.s32.totalorder %s16, 1
    %p132 = por %p130, %p131
    %p133 = scmp.ne.s32.totalorder %s124, %s125
    %p134 = scmp.eq.s32.totalorder %s16, 0
    %p135 = por %p133, %p134
    %p136 = scmp.ne.s32.totalorder %s124, %s125
    %p137 = scmp.eq.s32.totalorder %s17, 1
    %p138 = por %p136, %p137
    %p140 = scmp.ne.s32.totalorder %s125, %s139
    %p141 = scmp.eq.s32.totalorder %s17, 0
    %p142 = por %p140, %p141
    %s143 = ssub.s32 %s18, %s30
    %s144 = ssub.s32 %s19, %s26
    %s145 = sor.u32 %s143, %s144
    %p146 = scmp.eq.s32.totalorder %s145, 0
    %s148 = sadd.s32 %s147, 1
    %s149 = scalar_select %p146, %s147, %s148
    %p152 = pneg %p146
    %p153 = scmp.eq.s32.totalorder %s11, 1
    %p154 = por %p152, %p153
    %p155 = scmp.ne.s32.totalorder %s147, %s150
    %p156 = scmp.eq.s32.totalorder %s11, 0
    %p157 = por %p155, %p156
    %p158 = scmp.ne.s32.totalorder %s147, %s150
    %p159 = scmp.eq.s32.totalorder %s16, 1
    %p160 = por %p158, %p159
    %p161 = scmp.ne.s32.totalorder %s150, %s151
    %p162 = scmp.eq.s32.totalorder %s16, 0
    %p163 = por %p161, %p162
    %p164 = scmp.ne.s32.totalorder %s150, %s151
    %p165 = scmp.eq.s32.totalorder %s17, 1
    %p166 = por %p164, %p165
    %p168 = scmp.ne.s32.totalorder %s151, %s167
    %p169 = scmp.eq.s32.totalorder %s17, 0
    %p170 = por %p168, %p169
    %p171 = scmp.le.s32.totalorder 1, %s11
    %p172 = scmp.lt.s32.totalorder %s11, 3
    %p173 = pnand %p171, %p172
    %p174 = pneg %p173
    // Predicated region
    $region9: #{swad_forward.1} parent=5 // pred_check
      _
    $region10: #{swad_forward.1} parent=5 // pred_check_branch
      %176 = sbr.rel (%p173) target = $region12
    $region11: #{swad_forward.1} parent=5 // pred_region
      %s177 = ssub.s32 %s11, 1
      // Predicated region
      $region13: #{swad_forward.1} parent=11 // pred_check
        %p178 = pneg %p72
      $region14: #{swad_forward.1} parent=11 // pred_check_branch
        %180 = sbr.rel (%p178) target = $region16
      $region15: #{swad_forward.1} parent=11 // pred_region
        _
      $region16: #{swad_forward.1} parent=11 // pred_fallthru
        _
      // Predicated region
      $region17: #{swad_forward.1} parent=11 // pred_check
        %p181 = pneg %p93
      $region18: #{swad_forward.1} parent=11 // pred_check_branch
        %183 = sbr.rel (%p181) target = $region20
      $region19: #{swad_forward.1} parent=11 // pred_region
        _
      $region20: #{swad_forward.1} parent=11 // pred_fallthru
        _
      // Predicated region
      $region21: #{swad_forward.1} parent=11 // pred_check
        %p184 = pneg %p114
      $region22: #{swad_forward.1} parent=11 // pred_check_branch
        %186 = sbr.rel (%p184) target = $region24
      $region23: #{swad_forward.1} parent=11 // pred_region
        _
      $region24: #{swad_forward.1} parent=11 // pred_fallthru
        _
      // Predicated region
      $region25: #{swad_forward.1} parent=11 // pred_check
        %p187 = pneg %p135
      $region26: #{swad_forward.1} parent=11 // pred_check_branch
        %189 = sbr.rel (%p187) target = $region28
      $region27: #{swad_forward.1} parent=11 // pred_region
        _
      $region28: #{swad_forward.1} parent=11 // pred_fallthru
        _
    $region12: #{swad_forward.1} parent=5 // pred_fallthru
      _
    %p190 = scmp.lt.s32.totalorder %s11, 2
    // Predicated region
    $region29: #{swad_forward.1} parent=5 // pred_check
      %p191 = pneg %p190
    $region30: #{swad_forward.1} parent=5 // pred_check_branch
      %193 = sbr.rel (%p191) target = $region32
    $region31: #{swad_forward.1} parent=5 // pred_region
      // Predicated region
      $region33: #{swad_forward.1} parent=31 // pred_check
        %p194 = pneg %p45
      $region34: #{swad_forward.1} parent=31 // pred_check_branch
        %196 = sbr.rel (%p194) target = $region36
      $region35: #{swad_forward.1} parent=31 // pred_region
        %p197 = scmp.lt.s32.totalorder %s18, 1
        %s198 = scalar_select %p197, %s18, 1
        %p199 = scmp.lt.s32.totalorder %s19, 0
        %s200 = scalar_select %p199, %s19, 0
        %s201 = smul.addr %s198, 32
        %s202 = sadd.s32 %s200, %s201
        %s203 = smul.addr %s202, 8
        %s204 = scalar_lea.vmem %s0, %s203
      $region36: #{swad_forward.1} parent=31 // pred_fallthru
        _
    $region32: #{swad_forward.1} parent=5 // pred_fallthru
      _
    %p205 = scmp.le.s32.totalorder 1, %s11
    %p206 = scmp.lt.s32.totalorder %s11, 3
    %p207 = pnand %p205, %p206
    %p208 = pneg %p207
    // Predicated region
    $region37: #{swad_forward.1} parent=5 // pred_check
      _
    $region38: #{swad_forward.1} parent=5 // pred_check_branch
      %210 = sbr.rel (%p207) target = $region40
    $region39: #{swad_forward.1} parent=5 // pred_region
      %s211 = ssub.s32 %s11, 1
      %p212 = scmp.lt.s32.totalorder %s20, 1
      %s213 = scalar_select %p212, %s20, 1
      %p214 = scmp.lt.s32.totalorder %s21, 0
      %s215 = scalar_select %p214, %s21, 0
      %s216 = smul.addr %s213, 32
      %s217 = sadd.s32 %s215, %s216
      %s218 = smul.addr %s217, 8
      %s219 = scalar_lea.vmem %s0, %s218
      %p220 = pneg %p51
      %p221 = pneg %p48
      %p222 = pneg %p72
      %p223 = pneg %p69
      %p224 = pneg %p93
      %p225 = pneg %p90
      %p226 = pneg %p114
      %p227 = pneg %p111
      %p228 = pneg %p135
      %p229 = pneg %p132
      %p230 = pneg %p163
      %p231 = pneg %p160
      %p232 = scmp.lt.s32.totalorder %s20, 1
      %s233 = scalar_select %p232, %s20, 1
      %p234 = scmp.lt.s32.totalorder %s21, 0
      %s235 = scalar_select %p234, %s21, 0
      %s236 = smul.addr %s233, 12
      %s237 = sadd.s32 %s235, %s236
      %s238 = smul.addr %s237, 4
      %s239 = scalar_lea.vmem %s5, %s238
      %p240 = scmp.lt.s32.totalorder %s20, 1
      %s241 = scalar_select %p240, %s20, 1
      %p242 = scmp.lt.s32.totalorder %s21, 0
      %s243 = scalar_select %p242, %s21, 0
      %s244 = smul.addr %s241, 32
      %s245 = sadd.s32 %s243, %s244
      %s246 = smul.addr %s245, 8
      %s247 = scalar_lea.vmem %s0, %s246
      %p248 = scmp.lt.s32.totalorder %s20, 1
      %s249 = scalar_select %p248, %s20, 1
      %p250 = scmp.lt.s32.totalorder %s21, 0
      %s251 = scalar_select %p250, %s21, 0
      %s252 = smul.addr %s249, 12
      %s253 = sadd.s32 %s251, %s252
      %s254 = smul.addr %s253, 4
      %s255 = scalar_lea.vmem %s5, %s254
      %v257 = vld [vmem:[%s247] sm:$0xff]
      %v258 = vld [vmem:[%s247 + $0x8] sm:$0xff]
      %v259 = vld [vmem:[%s247 + $0x10] sm:$0xff]
      %v260 = vld [vmem:[%s247 + $0x18] sm:$0xff]
      %v261 = vld [vmem:[%s247 + $0x20] sm:$0xff]
      %v262 = vld [vmem:[%s247 + $0x28] sm:$0xff]
      %v263 = vld [vmem:[%s247 + $0x30] sm:$0xff]
      %v264 = vld [vmem:[%s247 + $0x38] sm:$0xff]
      %v265 = vld [vmem:[%s247 + $0x40] sm:$0xff]
      %v266 = vld [vmem:[%s247 + $0x48] sm:$0xff]
      %v267 = vld [vmem:[%s247 + $0x50] sm:$0xff]
      %v268 = vld [vmem:[%s247 + $0x58] sm:$0xff]
      %v269 = vld [vmem:[%s247 + $0x60] sm:$0xff]
      %v270 = vld [vmem:[%s247 + $0x68] sm:$0xff]
      %v271 = vld [vmem:[%s247 + $0x70] sm:$0xff]
      %v272 = vld [vmem:[%s247 + $0x78] sm:$0xff]
      %v273 = vld [vmem:[%s247 + $0x80] sm:$0xff]
      %v274 = vld [vmem:[%s247 + $0x88] sm:$0xff]
      %v275 = vld [vmem:[%s247 + $0x90] sm:$0xff]
      %v276 = vld [vmem:[%s247 + $0x98] sm:$0xff]
      %v277 = vld [vmem:[%s247 + $0xa0] sm:$0xff]
      %v278 = vld [vmem:[%s247 + $0xa8] sm:$0xff]
      %v279 = vld [vmem:[%s247 + $0xb0] sm:$0xff]
      %v280 = vld [vmem:[%s247 + $0xb8] sm:$0xff]
      %v281 = vld [vmem:[%s247 + $0xc0] sm:$0xff]
      %v282 = vld [vmem:[%s247 + $0xc8] sm:$0xff]
      %v283 = vld [vmem:[%s247 + $0xd0] sm:$0xff]
      %v284 = vld [vmem:[%s247 + $0xd8] sm:$0xff]
      %v285 = vld [vmem:[%s247 + $0xe0] sm:$0xff]
      %v286 = vld [vmem:[%s247 + $0xe8] sm:$0xff]
      %v287 = vld [vmem:[%s247 + $0xf0] sm:$0xff]
      %v288 = vld [vmem:[%s247 + $0xf8] sm:$0xff]
      %v289 = vpack.c.bf16 %v258, %v257
      %v290 = vpack.c.bf16 %v260, %v259
      %v291 = vpack.c.bf16 %v262, %v261
      %v292 = vpack.c.bf16 %v264, %v263
      %v293 = vpack.c.bf16 %v266, %v265
      %v294 = vpack.c.bf16 %v268, %v267
      %v295 = vpack.c.bf16 %v270, %v269
      %v296 = vpack.c.bf16 %v272, %v271
      %v297 = vpack.c.bf16 %v274, %v273
      %v298 = vpack.c.bf16 %v276, %v275
      %v299 = vpack.c.bf16 %v278, %v277
      %v300 = vpack.c.bf16 %v280, %v279
      %v301 = vpack.c.bf16 %v282, %v281
      %v302 = vpack.c.bf16 %v284, %v283
      %v303 = vpack.c.bf16 %v286, %v285
      %v304 = vpack.c.bf16 %v288, %v287
      %v305 = vld [vmem:[%s1] sm:$0xff]
      %v306 = vld [vmem:[%s1 + $0x8] sm:$0xff]
      %v307 = vld [vmem:[%s1 + $0x10] sm:$0xff]
      %v308 = vld [vmem:[%s1 + $0x18] sm:$0xff]
      %v309 = vld [vmem:[%s1 + $0x20] sm:$0xff]
      %v310 = vld [vmem:[%s1 + $0x28] sm:$0xff]
      %v311 = vld [vmem:[%s1 + $0x30] sm:$0xff]
      %v312 = vld [vmem:[%s1 + $0x38] sm:$0xff]
      %v313 = vld [vmem:[%s1 + $0x40] sm:$0xff]
      %v314 = vld [vmem:[%s1 + $0x48] sm:$0xff]
      %v315 = vld [vmem:[%s1 + $0x50] sm:$0xff]
      %v316 = vld [vmem:[%s1 + $0x58] sm:$0xff]
      %v317 = vld [vmem:[%s1 + $0x60] sm:$0xff]
      %v318 = vld [vmem:[%s1 + $0x68] sm:$0xff]
      %v319 = vld [vmem:[%s1 + $0x70] sm:$0xff]
      %v320 = vld [vmem:[%s1 + $0x78] sm:$0xff]
      %v321 = vld [vmem:[%s1 + $0x80] sm:$0xff]
      %v322 = vld [vmem:[%s1 + $0x88] sm:$0xff]
      %v323 = vld [vmem:[%s1 + $0x90] sm:$0xff]
      %v324 = vld [vmem:[%s1 + $0x98] sm:$0xff]
      %v325 = vld [vmem:[%s1 + $0xa0] sm:$0xff]
      %v326 = vld [vmem:[%s1 + $0xa8] sm:$0xff]
      %v327 = vld [vmem:[%s1 + $0xb0] sm:$0xff]
      %v328 = vld [vmem:[%s1 + $0xb8] sm:$0xff]
      %v329 = vld [vmem:[%s1 + $0xc0] sm:$0xff]
      %v330 = vld [vmem:[%s1 + $0xc8] sm:$0xff]
      %v331 = vld [vmem:[%s1 + $0xd0] sm:$0xff]
      %v332 = vld [vmem:[%s1 + $0xd8] sm:$0xff]
      %v333 = vld [vmem:[%s1 + $0xe0] sm:$0xff]
      %v334 = vld [vmem:[%s1 + $0xe8] sm:$0xff]
      %v335 = vld [vmem:[%s1 + $0xf0] sm:$0xff]
      %v336 = vld [vmem:[%s1 + $0xf8] sm:$0xff]
      %v337 = vld [vmem:[%s2] sm:$0xff]
      %v338 = vld [vmem:[%s2 + $0x8] sm:$0xff]
      %v339 = vld [vmem:[%s2 + $0x10] sm:$0xff]
      %v340 = vld [vmem:[%s2 + $0x18] sm:$0xff]
      %v341 = vld [vmem:[%s2 + $0x20] sm:$0xff]
      %v342 = vld [vmem:[%s2 + $0x28] sm:$0xff]
      %v343 = vld [vmem:[%s2 + $0x30] sm:$0xff]
      %v344 = vld [vmem:[%s2 + $0x38] sm:$0xff]
      %v345 = vld [vmem:[%s2 + $0x40] sm:$0xff]
      %v346 = vld [vmem:[%s2 + $0x48] sm:$0xff]
      %v347 = vld [vmem:[%s2 + $0x50] sm:$0xff]
      %v348 = vld [vmem:[%s2 + $0x58] sm:$0xff]
      %v349 = vld [vmem:[%s2 + $0x60] sm:$0xff]
      %v350 = vld [vmem:[%s2 + $0x68] sm:$0xff]
      %v351 = vld [vmem:[%s2 + $0x70] sm:$0xff]
      %v352 = vld [vmem:[%s2 + $0x78] sm:$0xff]
      %v353 = vld [vmem:[%s2 + $0x80] sm:$0xff]
      %v354 = vld [vmem:[%s2 + $0x88] sm:$0xff]
      %v355 = vld [vmem:[%s2 + $0x90] sm:$0xff]
      %v356 = vld [vmem:[%s2 + $0x98] sm:$0xff]
      %v357 = vld [vmem:[%s2 + $0xa0] sm:$0xff]
      %v358 = vld [vmem:[%s2 + $0xa8] sm:$0xff]
      %v359 = vld [vmem:[%s2 + $0xb0] sm:$0xff]
      %v360 = vld [vmem:[%s2 + $0xb8] sm:$0xff]
      %v361 = vld [vmem:[%s2 + $0xc0] sm:$0xff]
      %v362 = vld [vmem:[%s2 + $0xc8] sm:$0xff]
      %v363 = vld [vmem:[%s2 + $0xd0] sm:$0xff]
      %v364 = vld [vmem:[%s2 + $0xd8] sm:$0xff]
      %v365 = vld [vmem:[%s2 + $0xe0] sm:$0xff]
      %v366 = vld [vmem:[%s2 + $0xe8] sm:$0xff]
      %v367 = vld [vmem:[%s2 + $0xf0] sm:$0xff]
      %v368 = vld [vmem:[%s2 + $0xf8] sm:$0xff]
      %370 = vset.pattern.permute.xlu0 0
      %371 = vperm.xlu0 %370, %v337
      %v372 = vpop.permute.xlu0 %371
      %375 = vset.pattern.permute.xlu0 0
      %376 = vperm.xlu0 %375, %v338
      %v377 = vpop.permute.xlu0 %376
      %380 = vset.pattern.permute.xlu0 0
      %381 = vperm.xlu0 %380, %v339
      %v382 = vpop.permute.xlu0 %381
      %385 = vset.pattern.permute.xlu0 0
      %386 = vperm.xlu0 %385, %v340
      %v387 = vpop.permute.xlu0 %386
      %390 = vset.pattern.permute.xlu0 0
      %391 = vperm.xlu0 %390, %v341
      %v392 = vpop.permute.xlu0 %391
      %395 = vset.pattern.permute.xlu0 0
      %396 = vperm.xlu0 %395, %v342
      %v397 = vpop.permute.xlu0 %396
      %400 = vset.pattern.permute.xlu0 0
      %401 = vperm.xlu0 %400, %v343
      %v402 = vpop.permute.xlu0 %401
      %405 = vset.pattern.permute.xlu0 0
      %406 = vperm.xlu0 %405, %v344
      %v407 = vpop.permute.xlu0 %406
      %410 = vset.pattern.permute.xlu0 0
      %411 = vperm.xlu0 %410, %v345
      %v412 = vpop.permute.xlu0 %411
      %415 = vset.pattern.permute.xlu0 0
      %416 = vperm.xlu0 %415, %v346
      %v417 = vpop.permute.xlu0 %416
      %420 = vset.pattern.permute.xlu0 0
      %421 = vperm.xlu0 %420, %v347
      %v422 = vpop.permute.xlu0 %421
      %425 = vset.pattern.permute.xlu0 0
      %426 = vperm.xlu0 %425, %v348
      %v427 = vpop.permute.xlu0 %426
      %430 = vset.pattern.permute.xlu0 0
      %431 = vperm.xlu0 %430, %v349
      %v432 = vpop.permute.xlu0 %431
      %435 = vset.pattern.permute.xlu0 0
      %436 = vperm.xlu0 %435, %v350
      %v437 = vpop.permute.xlu0 %436
      %440 = vset.pattern.permute.xlu0 0
      %441 = vperm.xlu0 %440, %v351
      %v442 = vpop.permute.xlu0 %441
      %445 = vset.pattern.permute.xlu0 0
      %446 = vperm.xlu0 %445, %v352
      %v447 = vpop.permute.xlu0 %446
      %450 = vset.pattern.permute.xlu0 0
      %451 = vperm.xlu0 %450, %v353
      %v452 = vpop.permute.xlu0 %451
      %455 = vset.pattern.permute.xlu0 0
      %456 = vperm.xlu0 %455, %v354
      %v457 = vpop.permute.xlu0 %456
      %460 = vset.pattern.permute.xlu0 0
      %461 = vperm.xlu0 %460, %v355
      %v462 = vpop.permute.xlu0 %461
      %465 = vset.pattern.permute.xlu0 0
      %466 = vperm.xlu0 %465, %v356
      %v467 = vpop.permute.xlu0 %466
      %470 = vset.pattern.permute.xlu0 0
      %471 = vperm.xlu0 %470, %v357
      %v472 = vpop.permute.xlu0 %471
      %475 = vset.pattern.permute.xlu0 0
      %476 = vperm.xlu0 %475, %v358
      %v477 = vpop.permute.xlu0 %476
      %480 = vset.pattern.permute.xlu0 0
      %481 = vperm.xlu0 %480, %v359
      %v482 = vpop.permute.xlu0 %481
      %485 = vset.pattern.permute.xlu0 0
      %486 = vperm.xlu0 %485, %v360
      %v487 = vpop.permute.xlu0 %486
      %490 = vset.pattern.permute.xlu0 0
      %491 = vperm.xlu0 %490, %v361
      %v492 = vpop.permute.xlu0 %491
      %495 = vset.pattern.permute.xlu0 0
      %496 = vperm.xlu0 %495, %v362
      %v497 = vpop.permute.xlu0 %496
      %500 = vset.pattern.permute.xlu0 0
      %501 = vperm.xlu0 %500, %v363
      %v502 = vpop.permute.xlu0 %501
      %505 = vset.pattern.permute.xlu0 0
      %506 = vperm.xlu0 %505, %v364
      %v507 = vpop.permute.xlu0 %506
      %510 = vset.pattern.permute.xlu0 0
      %511 = vperm.xlu0 %510, %v365
      %v512 = vpop.permute.xlu0 %511
      %515 = vset.pattern.permute.xlu0 0
      %516 = vperm.xlu0 %515, %v366
      %v517 = vpop.permute.xlu0 %516
      %520 = vset.pattern.permute.xlu0 0
      %521 = vperm.xlu0 %520, %v367
      %v522 = vpop.permute.xlu0 %521
      %525 = vset.pattern.permute.xlu0 0
      %526 = vperm.xlu0 %525, %v368
      %v527 = vpop.permute.xlu0 %526
      %v561 = vunpack.c.l.b16 %v305
      %v562 = vunpack.c.h.b16 %v305
      %v563 = vunpack.c.l.b16 %v306
      %v564 = vunpack.c.h.b16 %v306
      %v565 = vunpack.c.l.b16 %v307
      %v566 = vunpack.c.h.b16 %v307
      %v567 = vunpack.c.l.b16 %v308
      %v568 = vunpack.c.h.b16 %v308
      %v569 = vunpack.c.l.b16 %v309
      %v570 = vunpack.c.h.b16 %v309
      %v571 = vunpack.c.l.b16 %v310
      %v572 = vunpack.c.h.b16 %v310
      %v573 = vunpack.c.l.b16 %v311
      %v574 = vunpack.c.h.b16 %v311
      %v575 = vunpack.c.l.b16 %v312
      %v576 = vunpack.c.h.b16 %v312
      %v577 = vunpack.c.l.b16 %v313
      %v578 = vunpack.c.h.b16 %v313
      %v579 = vunpack.c.l.b16 %v314
      %v580 = vunpack.c.h.b16 %v314
      %v581 = vunpack.c.l.b16 %v315
      %v582 = vunpack.c.h.b16 %v315
      %v583 = vunpack.c.l.b16 %v316
      %v584 = vunpack.c.h.b16 %v316
      %v585 = vunpack.c.l.b16 %v317
      %v586 = vunpack.c.h.b16 %v317
      %v587 = vunpack.c.l.b16 %v318
      %v588 = vunpack.c.h.b16 %v318
      %v589 = vunpack.c.l.b16 %v319
      %v590 = vunpack.c.h.b16 %v319
      %v591 = vunpack.c.l.b16 %v320
      %v592 = vunpack.c.h.b16 %v320
      %v593 = vunpack.c.l.b16 %v321
      %v594 = vunpack.c.h.b16 %v321
      %v595 = vunpack.c.l.b16 %v322
      %v596 = vunpack.c.h.b16 %v322
      %v597 = vunpack.c.l.b16 %v323
      %v598 = vunpack.c.h.b16 %v323
      %v599 = vunpack.c.l.b16 %v324
      %v600 = vunpack.c.h.b16 %v324
      %v601 = vunpack.c.l.b16 %v325
      %v602 = vunpack.c.h.b16 %v325
      %v603 = vunpack.c.l.b16 %v326
      %v604 = vunpack.c.h.b16 %v326
      %v605 = vunpack.c.l.b16 %v327
      %v606 = vunpack.c.h.b16 %v327
      %v607 = vunpack.c.l.b16 %v328
      %v608 = vunpack.c.h.b16 %v328
      %v609 = vunpack.c.l.b16 %v329
      %v610 = vunpack.c.h.b16 %v329
      %v611 = vunpack.c.l.b16 %v330
      %v612 = vunpack.c.h.b16 %v330
      %v613 = vunpack.c.l.b16 %v331
      %v614 = vunpack.c.h.b16 %v331
      %v615 = vunpack.c.l.b16 %v332
      %v616 = vunpack.c.h.b16 %v332
      %v617 = vunpack.c.l.b16 %v333
      %v618 = vunpack.c.h.b16 %v333
      %v619 = vunpack.c.l.b16 %v334
      %v620 = vunpack.c.h.b16 %v334
      %v621 = vunpack.c.l.b16 %v335
      %v622 = vunpack.c.h.b16 %v335
      %v623 = vunpack.c.l.b16 %v336
      %v624 = vunpack.c.h.b16 %v336
      %v625 = vpack.c.b16 %v563, %v561
      %v626 = vpack.c.b16 %v564, %v562
      %v627 = vpack.c.b16 %v567, %v565
      %v628 = vpack.c.b16 %v568, %v566
      %v629 = vpack.c.b16 %v571, %v569
      %v630 = vpack.c.b16 %v572, %v570
      %v631 = vpack.c.b16 %v575, %v573
      %v632 = vpack.c.b16 %v576, %v574
      %v633 = vpack.c.b16 %v579, %v577
      %v634 = vpack.c.b16 %v580, %v578
      %v635 = vpack.c.b16 %v583, %v581
      %v636 = vpack.c.b16 %v584, %v582
      %v637 = vpack.c.b16 %v587, %v585
      %v638 = vpack.c.b16 %v588, %v586
      %v639 = vpack.c.b16 %v591, %v589
      %v640 = vpack.c.b16 %v592, %v590
      %v641 = vpack.c.b16 %v595, %v593
      %v642 = vpack.c.b16 %v596, %v594
      %v643 = vpack.c.b16 %v599, %v597
      %v644 = vpack.c.b16 %v600, %v598
      %v645 = vpack.c.b16 %v603, %v601
      %v646 = vpack.c.b16 %v604, %v602
      %v647 = vpack.c.b16 %v607, %v605
      %v648 = vpack.c.b16 %v608, %v606
      %v649 = vpack.c.b16 %v611, %v609
      %v650 = vpack.c.b16 %v612, %v610
      %v651 = vpack.c.b16 %v615, %v613
      %v652 = vpack.c.b16 %v616, %v614
      %v653 = vpack.c.b16 %v619, %v617
      %v654 = vpack.c.b16 %v620, %v618
      %v655 = vpack.c.b16 %v623, %v621
      %v656 = vpack.c.b16 %v624, %v622
      %689 = vmatprep.subr.bf16.mxu0 0
      %690 = vmatpush1.bf16.msra.mxu0 %v289
      %691 = vmatprep.subr.bf16.mxu0 0
      %692 = vmatpush1.bf16.msra.mxu0 %v290
      %693 = vmatprep.subr.bf16.mxu0 0
      %694 = vmatpush1.bf16.msra.mxu0 %v291
      %695 = vmatprep.subr.bf16.mxu0 0
      %696 = vmatpush1.bf16.msra.mxu0 %v292
      %697 = vmatprep.subr.bf16.mxu0 0
      %698 = vmatpush1.bf16.msra.mxu0 %v293
      %699 = vmatprep.subr.bf16.mxu0 0
      %700 = vmatpush1.bf16.msra.mxu0 %v294
      %701 = vmatprep.subr.bf16.mxu0 0
      %702 = vmatpush1.bf16.msra.mxu0 %v295
      %703 = vmatprep.subr.bf16.mxu0 0
      %704 = vmatpush1.bf16.msra.mxu0 %v296
      %705 = vmatprep.subr.bf16.mxu0 0
      %706 = vmatpush1.bf16.msra.mxu0 %v297
      %707 = vmatprep.subr.bf16.mxu0 0
      %708 = vmatpush1.bf16.msra.mxu0 %v298
      %709 = vmatprep.subr.bf16.mxu0 0
      %710 = vmatpush1.bf16.msra.mxu0 %v299
      %711 = vmatprep.subr.bf16.mxu0 0
      %712 = vmatpush1.bf16.msra.mxu0 %v300
      %713 = vmatprep.subr.bf16.mxu0 0
      %714 = vmatpush1.bf16.msra.mxu0 %v301
      %715 = vmatprep.subr.bf16.mxu0 0
      %716 = vmatpush1.bf16.msra.mxu0 %v302
      %717 = vmatprep.subr.bf16.mxu0 0
      %718 = vmatpush1.bf16.msra.mxu0 %v303
      %719 = vmatprep.subr.bf16.mxu0 0
      %720 = vmatpush1.bf16.msra.mxu0 %v304
      %721 = vmatprep.mubr.bf16.mxu0 %v626
      %722 = vmatmul.mubr.bf16.gmra.mrb[0].mxu0 %v625
      %v723 = vpop.f32.mrb[0].mxu0
      %v724 = vadd.f32 %v372, %v723
      %v725 = vpop.f32.mrb[0].mxu0
      %v726 = vpop.f32.mrb[0].mxu0
      %v727 = vadd.f32 %v377, %v726
      %v728 = vpop.f32.mrb[0].mxu0
      %729 = vmatprep.mubr.bf16.mxu0 %v628
      %730 = vmatmul.mubr.bf16.gmra.mrb[0].mxu0 %v627
      %v731 = vpop.f32.mrb[0].mxu0
      %v732 = vadd.f32 %v382, %v731
      %v733 = vpop.f32.mrb[0].mxu0
      %v734 = vpop.f32.mrb[0].mxu0
      %v735 = vadd.f32 %v387, %v734
      %v736 = vpop.f32.mrb[0].mxu0
      %737 = vmatprep.mubr.bf16.mxu0 %v630
      %738 = vmatmul.mubr.bf16.gmra.mrb[0].mxu0 %v629
      %v739 = vpop.f32.mrb[0].mxu0
      %v740 = vadd.f32 %v392, %v739
      %v741 = vpop.f32.mrb[0].mxu0
      %v742 = vpop.f32.mrb[0].mxu0
      %v743 = vadd.f32 %v397, %v742
      %v744 = vpop.f32.mrb[0].mxu0
      %745 = vmatprep.mubr.bf16.mxu0 %v632
      %746 = vmatmul.mubr.bf16.gmra.mrb[0].mxu0 %v631
      %v747 = vpop.f32.mrb[0].mxu0
      %v748 = vadd.f32 %v402, %v747
      %v749 = vpop.f32.mrb[0].mxu0
      %v750 = vpop.f32.mrb[0].mxu0
      %v751 = vadd.f32 %v407, %v750
      %v752 = vpop.f32.mrb[0].mxu0
      %753 = vmatprep.mubr.bf16.mxu0 %v634
      %754 = vmatmul.mubr.bf16.gmra.mrb[0].mxu0 %v633
      %v755 = vpop.f32.mrb[0].mxu0
      %v756 = vadd.f32 %v412, %v755
      %v757 = vpop.f32.mrb[0].mxu0
      %v758 = vpop.f32.mrb[0].mxu0
      %v759 = vadd.f32 %v417, %v758
      %v760 = vpop.f32.mrb[0].mxu0
      %761 = vmatprep.mubr.bf16.mxu0 %v636
      %762 = vmatmul.mubr.bf16.gmra.mrb[0].mxu0 %v635
      %v763 = vpop.f32.mrb[0].mxu0
      %v764 = vadd.f32 %v422, %v763
      %v765 = vpop.f32.mrb[0].mxu0
      %v766 = vpop.f32.mrb[0].mxu0
      %v767 = vadd.f32 %v427, %v766
      %v768 = vpop.f32.mrb[0].mxu0
      %769 = vmatprep.mubr.bf16.mxu0 %v638
      %770 = vmatmul.mubr.bf16.gmra.mrb[0].mxu0 %v637
      %v771 = vpop.f32.mrb[0].mxu0
      %v772 = vadd.f32 %v432, %v771
      %v773 = vpop.f32.mrb[0].mxu0
      %v774 = vpop.f32.mrb[0].mxu0
      %v775 = vadd.f32 %v437, %v774
      %v776 = vpop.f32.mrb[0].mxu0
      %777 = vmatprep.mubr.bf16.mxu0 %v640
      %778 = vmatmul.mubr.bf16.gmra.mrb[0].mxu0 %v639
      %v779 = vpop.f32.mrb[0].mxu0
      %v780 = vadd.f32 %v442, %v779
      %v781 = vpop.f32.mrb[0].mxu0
      %v782 = vpop.f32.mrb[0].mxu0
      %v783 = vadd.f32 %v447, %v782
      %v784 = vpop.f32.mrb[0].mxu0
      %785 = vmatprep.mubr.bf16.mxu0 %v642
      %786 = vmatmul.mubr.bf16.gmra.mrb[0].mxu0 %v641
      %v787 = vpop.f32.mrb[0].mxu0
      %v788 = vadd.f32 %v452, %v787
      %v789 = vpop.f32.mrb[0].mxu0
      %v790 = vpop.f32.mrb[0].mxu0
      %v791 = vadd.f32 %v457, %v790
      %v792 = vpop.f32.mrb[0].mxu0
      %793 = vmatprep.mubr.bf16.mxu0 %v644
      %794 = vmatmul.mubr.bf16.gmra.mrb[0].mxu0 %v643
      %v795 = vpop.f32.mrb[0].mxu0
      %v796 = vadd.f32 %v462, %v795
      %v797 = vpop.f32.mrb[0].mxu0
      %v798 = vpop.f32.mrb[0].mxu0
      %v799 = vadd.f32 %v467, %v798
      %v800 = vpop.f32.mrb[0].mxu0
      %801 = vmatprep.mubr.bf16.mxu0 %v646
      %802 = vmatmul.mubr.bf16.gmra.mrb[0].mxu0 %v645
      %v803 = vpop.f32.mrb[0].mxu0
      %v804 = vadd.f32 %v472, %v803
      %v805 = vpop.f32.mrb[0].mxu0
      %v806 = vpop.f32.mrb[0].mxu0
      %v807 = vadd.f32 %v477, %v806
      %v808 = vpop.f32.mrb[0].mxu0
      %809 = vmatprep.mubr.bf16.mxu0 %v648
      %810 = vmatmul.mubr.bf16.gmra.mrb[0].mxu0 %v647
      %v811 = vpop.f32.mrb[0].mxu0
      %v812 = vadd.f32 %v482, %v811
      %v813 = vpop.f32.mrb[0].mxu0
      %v814 = vpop.f32.mrb[0].mxu0
      %v815 = vadd.f32 %v487, %v814
      %v816 = vpop.f32.mrb[0].mxu0
      %817 = vmatprep.mubr.bf16.mxu0 %v650
      %818 = vmatmul.mubr.bf16.gmra.mrb[0].mxu0 %v649
      %v819 = vpop.f32.mrb[0].mxu0
      %v820 = vadd.f32 %v492, %v819
      %v821 = vpop.f32.mrb[0].mxu0
      %v822 = vpop.f32.mrb[0].mxu0
      %v823 = vadd.f32 %v497, %v822
      %v824 = vpop.f32.mrb[0].mxu0
      %825 = vmatprep.mubr.bf16.mxu0 %v652
      %826 = vmatmul.mubr.bf16.gmra.mrb[0].mxu0 %v651
      %v827 = vpop.f32.mrb[0].mxu0
      %v828 = vadd.f32 %v502, %v827
      %v829 = vpop.f32.mrb[0].mxu0
      %v830 = vpop.f32.mrb[0].mxu0
      %v831 = vadd.f32 %v507, %v830
      %v832 = vpop.f32.mrb[0].mxu0
      %833 = vmatprep.mubr.bf16.mxu0 %v654
      %834 = vmatmul.mubr.bf16.gmra.mrb[0].mxu0 %v653
      %v835 = vpop.f32.mrb[0].mxu0
      %v836 = vadd.f32 %v512, %v835
      %v837 = vpop.f32.mrb[0].mxu0
      %v838 = vpop.f32.mrb[0].mxu0
      %v839 = vadd.f32 %v517, %v838
      %v840 = vpop.f32.mrb[0].mxu0
      %841 = vmatprep.mubr.bf16.mxu0 %v656
      %842 = vmatmul.mubr.bf16.gmra.mrb[0].mxu0 %v655
      %v843 = vpop.f32.mrb[0].mxu0
      %v844 = vadd.f32 %v522, %v843
      %v845 = vpop.f32.mrb[0].mxu0
      %v846 = vpop.f32.mrb[0].mxu0
      %v847 = vadd.f32 %v527, %v846
      %v848 = vpop.f32.mrb[0].mxu0
      %849 = vdwg.mxu0
      %v850 = vmax.f32 %v724, 0.0
      %v851 = vmax.f32 %v727, 0.0
      %v852 = vmax.f32 %v732, 0.0
      %v853 = vmax.f32 %v735, 0.0
      %v854 = vmax.f32 %v740, 0.0
      %v855 = vmax.f32 %v743, 0.0
      %v856 = vmax.f32 %v748, 0.0
      %v857 = vmax.f32 %v751, 0.0
      %v858 = vmax.f32 %v756, 0.0
      %v859 = vmax.f32 %v759, 0.0
      %v860 = vmax.f32 %v764, 0.0
      %v861 = vmax.f32 %v767, 0.0
      %v862 = vmax.f32 %v772, 0.0
      %v863 = vmax.f32 %v775, 0.0
      %v864 = vmax.f32 %v780, 0.0
      %v865 = vmax.f32 %v783, 0.0
      %v866 = vmax.f32 %v788, 0.0
      %v867 = vmax.f32 %v791, 0.0
      %v868 = vmax.f32 %v796, 0.0
      %v869 = vmax.f32 %v799, 0.0
      %v870 = vmax.f32 %v804, 0.0
      %v871 = vmax.f32 %v807, 0.0
      %v872 = vmax.f32 %v812, 0.0
      %v873 = vmax.f32 %v815, 0.0
      %v874 = vmax.f32 %v820, 0.0
      %v875 = vmax.f32 %v823, 0.0
      %v876 = vmax.f32 %v828, 0.0
      %v877 = vmax.f32 %v831, 0.0
      %v878 = vmax.f32 %v836, 0.0
      %v879 = vmax.f32 %v839, 0.0
      %v880 = vmax.f32 %v844, 0.0
      %v881 = vmax.f32 %v847, 0.0
      %v882 = vld [vmem:[%s3] sm:$0xff]
      %v883 = vld [vmem:[%s3 + $0x8] sm:$0xff]
      %v884 = vld [vmem:[%s3 + $0x10] sm:$0xff]
      %v885 = vld [vmem:[%s3 + $0x18] sm:$0xff]
      %v886 = vld [vmem:[%s3 + $0x20] sm:$0xff]
      %v887 = vld [vmem:[%s3 + $0x28] sm:$0xff]
      %v888 = vld [vmem:[%s3 + $0x30] sm:$0xff]
      %v889 = vld [vmem:[%s3 + $0x38] sm:$0xff]
      %v890 = vld [vmem:[%s3 + $0x40] sm:$0xff]
      %v891 = vld [vmem:[%s3 + $0x48] sm:$0xff]
      %v892 = vld [vmem:[%s3 + $0x50] sm:$0xff]
      %v893 = vld [vmem:[%s3 + $0x58] sm:$0xff]
      %v894 = vpack.c.bf16 %v851, %v850
      %v895 = vpack.c.bf16 %v853, %v852
      %v896 = vpack.c.bf16 %v855, %v854
      %v897 = vpack.c.bf16 %v857, %v856
      %v898 = vpack.c.bf16 %v859, %v858
      %v899 = vpack.c.bf16 %v861, %v860
      %v900 = vpack.c.bf16 %v863, %v862
      %v901 = vpack.c.bf16 %v865, %v864
      %v902 = vpack.c.bf16 %v867, %v866
      %v903 = vpack.c.bf16 %v869, %v868
      %v904 = vpack.c.bf16 %v871, %v870
      %v905 = vpack.c.bf16 %v873, %v872
      %v906 = vpack.c.bf16 %v875, %v874
      %v907 = vpack.c.bf16 %v877, %v876
      %v908 = vpack.c.bf16 %v879, %v878
      %v909 = vpack.c.bf16 %v881, %v880
      %v910 = vld [vmem:[%s4] sm:$0xff]
      %v911 = vld [vmem:[%s4 + $0x8] sm:$0xff]
      %v912 = vld [vmem:[%s4 + $0x10] sm:$0xff]
      %v913 = vld [vmem:[%s4 + $0x18] sm:$0xff]
      %v914 = vld [vmem:[%s4 + $0x20] sm:$0xff]
      %v915 = vld [vmem:[%s4 + $0x28] sm:$0xff]
      %v916 = vld [vmem:[%s4 + $0x30] sm:$0xff]
      %v917 = vld [vmem:[%s4 + $0x38] sm:$0xff]
      %v918 = vld [vmem:[%s4 + $0x40] sm:$0xff]
      %v919 = vld [vmem:[%s4 + $0x48] sm:$0xff]
      %v920 = vld [vmem:[%s4 + $0x50] sm:$0xff]
      %v921 = vld [vmem:[%s4 + $0x58] sm:$0xff]
      %923 = vset.pattern.permute.xlu0 0
      %924 = vperm.xlu0 %923, %v910
      %v925 = vpop.permute.xlu0 %924
      %928 = vset.pattern.permute.xlu0 0
      %929 = vperm.xlu0 %928, %v911
      %v930 = vpop.permute.xlu0 %929
      %933 = vset.pattern.permute.xlu0 0
      %934 = vperm.xlu0 %933, %v912
      %v935 = vpop.permute.xlu0 %934
      %938 = vset.pattern.permute.xlu0 0
      %939 = vperm.xlu0 %938, %v913
      %v940 = vpop.permute.xlu0 %939
      %943 = vset.pattern.permute.xlu0 0
      %944 = vperm.xlu0 %943, %v914
      %v945 = vpop.permute.xlu0 %944
      %948 = vset.pattern.permute.xlu0 0
      %949 = vperm.xlu0 %948, %v915
      %v950 = vpop.permute.xlu0 %949
      %953 = vset.pattern.permute.xlu0 0
      %954 = vperm.xlu0 %953, %v916
      %v955 = vpop.permute.xlu0 %954
      %958 = vset.pattern.permute.xlu0 0
      %959 = vperm.xlu0 %958, %v917
      %v960 = vpop.permute.xlu0 %959
      %963 = vset.pattern.permute.xlu0 0
      %964 = vperm.xlu0 %963, %v918
      %v965 = vpop.permute.xlu0 %964
      %968 = vset.pattern.permute.xlu0 0
      %969 = vperm.xlu0 %968, %v919
      %v970 = vpop.permute.xlu0 %969
      %973 = vset.pattern.permute.xlu0 0
      %974 = vperm.xlu0 %973, %v920
      %v975 = vpop.permute.xlu0 %974
      %978 = vset.pattern.permute.xlu0 0
      %979 = vperm.xlu0 %978, %v921
      %v980 = vpop.permute.xlu0 %979
      %v994 = vunpack.c.l.b16 %v882
      %v995 = vunpack.c.h.b16 %v882
      %v996 = vunpack.c.l.b16 %v883
      %v997 = vunpack.c.h.b16 %v883
      %v998 = vunpack.c.l.b16 %v884
      %v999 = vunpack.c.h.b16 %v884
      %v1000 = vunpack.c.l.b16 %v885
      %v1001 = vunpack.c.h.b16 %v885
      %v1002 = vunpack.c.l.b16 %v886
      %v1003 = vunpack.c.h.b16 %v886
      %v1004 = vunpack.c.l.b16 %v887
      %v1005 = vunpack.c.h.b16 %v887
      %v1006 = vunpack.c.l.b16 %v888
      %v1007 = vunpack.c.h.b16 %v888
      %v1008 = vunpack.c.l.b16 %v889
      %v1009 = vunpack.c.h.b16 %v889
      %v1010 = vunpack.c.l.b16 %v890
      %v1011 = vunpack.c.h.b16 %v890
      %v1012 = vunpack.c.l.b16 %v891
      %v1013 = vunpack.c.h.b16 %v891
      %v1014 = vunpack.c.l.b16 %v892
      %v1015 = vunpack.c.h.b16 %v892
      %v1016 = vunpack.c.l.b16 %v893
      %v1017 = vunpack.c.h.b16 %v893
      %v1018 = vpack.c.b16 %v996, %v994
      %v1019 = vpack.c.b16 %v997, %v995
      %v1020 = vpack.c.b16 %v1000, %v998
      %v1021 = vpack.c.b16 %v1001, %v999
      %v1022 = vpack.c.b16 %v1004, %v1002
      %v1023 = vpack.c.b16 %v1005, %v1003
      %v1024 = vpack.c.b16 %v1008, %v1006
      %v1025 = vpack.c.b16 %v1009, %v1007
      %v1026 = vpack.c.b16 %v1012, %v1010
      %v1027 = vpack.c.b16 %v1013, %v1011
      %v1028 = vpack.c.b16 %v1016, %v1014
      %v1029 = vpack.c.b16 %v1017, %v1015
      %1042 = vmatprep.subr.bf16.mxu0 0
      %1043 = vmatpush1.bf16.msra.mxu0 %v894
      %1044 = vmatprep.subr.bf16.mxu0 0
      %1045 = vmatpush1.bf16.msra.mxu0 %v895
      %1046 = vmatprep.subr.bf16.mxu0 0
      %1047 = vmatpush1.bf16.msra.mxu0 %v896
      %1048 = vmatprep.subr.bf16.mxu0 0
      %1049 = vmatpush1.bf16.msra.mxu0 %v897
      %1050 = vmatprep.subr.bf16.mxu0 0
      %1051 = vmatpush1.bf16.msra.mxu0 %v898
      %1052 = vmatprep.subr.bf16.mxu0 0
      %1053 = vmatpush1.bf16.msra.mxu0 %v899
      %1054 = vmatprep.subr.bf16.mxu0 0
      %1055 = vmatpush1.bf16.msra.mxu0 %v900
      %1056 = vmatprep.subr.bf16.mxu0 0
      %1057 = vmatpush1.bf16.msra.mxu0 %v901
      %1058 = vmatprep.subr.bf16.mxu0 0
      %1059 = vmatpush1.bf16.msra.mxu0 %v902
      %1060 = vmatprep.subr.bf16.mxu0 0
      %1061 = vmatpush1.bf16.msra.mxu0 %v903
      %1062 = vmatprep.subr.bf16.mxu0 0
      %1063 = vmatpush1.bf16.msra.mxu0 %v904
      %1064 = vmatprep.subr.bf16.mxu0 0
      %1065 = vmatpush1.bf16.msra.mxu0 %v905
      %1066 = vmatprep.subr.bf16.mxu0 0
      %1067 = vmatpush1.bf16.msra.mxu0 %v906
      %1068 = vmatprep.subr.bf16.mxu0 0
      %1069 = vmatpush1.bf16.msra.mxu0 %v907
      %1070 = vmatprep.subr.bf16.mxu0 0
      %1071 = vmatpush1.bf16.msra.mxu0 %v908
      %1072 = vmatprep.subr.bf16.mxu0 0
      %1073 = vmatpush1.bf16.msra.mxu0 %v909
      %1074 = vmatprep.mubr.bf16.mxu0 %v1019
      %1075 = vmatmul.mubr.bf16.gmra.mrb[0].mxu0 %v1018
      %v1076 = vpop.f32.mrb[0].mxu0
      %v1077 = vadd.f32 %v925, %v1076
      %v1078 = vpop.f32.mrb[0].mxu0
      %v1079 = vpop.f32.mrb[0].mxu0
      %v1080 = vadd.f32 %v930, %v1079
      %v1081 = vpop.f32.mrb[0].mxu0
      %1082 = vmatprep.mubr.bf16.mxu0 %v1021
      %1083 = vmatmul.mubr.bf16.gmra.mrb[0].mxu0 %v1020
      %v1084 = vpop.f32.mrb[0].mxu0
      %v1085 = vadd.f32 %v935, %v1084
      %v1086 = vpop.f32.mrb[0].mxu0
      %v1087 = vpop.f32.mrb[0].mxu0
      %v1088 = vadd.f32 %v940, %v1087
      %v1089 = vpop.f32.mrb[0].mxu0
      %1090 = vmatprep.mubr.bf16.mxu0 %v1023
      %1091 = vmatmul.mubr.bf16.gmra.mrb[0].mxu0 %v1022
      %v1092 = vpop.f32.mrb[0].mxu0
      %v1093 = vadd.f32 %v945, %v1092
      %v1094 = vpop.f32.mrb[0].mxu0
      %v1095 = vpop.f32.mrb[0].mxu0
      %v1096 = vadd.f32 %v950, %v1095
      %v1097 = vpop.f32.mrb[0].mxu0
      %1098 = vmatprep.mubr.bf16.mxu0 %v1025
      %1099 = vmatmul.mubr.bf16.gmra.mrb[0].mxu0 %v1024
      %v1100 = vpop.f32.mrb[0].mxu0
      %v1101 = vadd.f32 %v955, %v1100
      %v1102 = vpop.f32.mrb[0].mxu0
      %v1103 = vpop.f32.mrb[0].mxu0
      %v1104 = vadd.f32 %v960, %v1103
      %v1105 = vpop.f32.mrb[0].mxu0
      %1106 = vmatprep.mubr.bf16.mxu0 %v1027
      %1107 = vmatmul.mubr.bf16.gmra.mrb[0].mxu0 %v1026
      %v1108 = vpop.f32.mrb[0].mxu0
      %v1109 = vadd.f32 %v965, %v1108
      %v1110 = vpop.f32.mrb[0].mxu0
      %v1111 = vpop.f32.mrb[0].mxu0
      %v1112 = vadd.f32 %v970, %v1111
      %v1113 = vpop.f32.mrb[0].mxu0
      %1114 = vmatprep.mubr.bf16.mxu0 %v1029
      %1115 = vmatmul.mubr.bf16.gmra.mrb[0].mxu0 %v1028
      %v1116 = vpop.f32.mrb[0].mxu0
      %v1117 = vadd.f32 %v975, %v1116
      %v1118 = vpop.f32.mrb[0].mxu0
      %v1119 = vpop.f32.mrb[0].mxu0
      %v1120 = vadd.f32 %v980, %v1119
      %v1121 = vpop.f32.mrb[0].mxu0
      %1122 = vdwg.mxu0
      %v1123 = vpack.c.bf16 %v1080, %v1077
      %v1124 = vpack.c.bf16 %v1088, %v1085
      %v1125 = vpack.c.bf16 %v1096, %v1093
      %v1126 = vpack.c.bf16 %v1104, %v1101
      %v1127 = vpack.c.bf16 %v1112, %v1109
      %v1128 = vpack.c.bf16 %v1120, %v1117
      %v1135 = vunpack.c.l.b16 %v1123
      %v1136 = vunpack.c.h.b16 %v1123
      %v1137 = vunpack.c.l.b16 %v1124
      %v1138 = vunpack.c.h.b16 %v1124
      %v1139 = vunpack.c.l.b16 %v1125
      %v1140 = vunpack.c.h.b16 %v1125
      %v1141 = vunpack.c.l.b16 %v1126
      %v1142 = vunpack.c.h.b16 %v1126
      %v1143 = vunpack.c.l.b16 %v1127
      %v1144 = vunpack.c.h.b16 %v1127
      %v1145 = vunpack.c.l.b16 %v1128
      %v1146 = vunpack.c.h.b16 %v1128
      %v1147 = vpack.c.b16 %v1135, %v1135
      %v1148 = vpack.c.b16 %v1136, %v1136
      %v1149 = vpack.c.b16 %v1137, %v1137
      %v1150 = vpack.c.b16 %v1138, %v1138
      %v1151 = vpack.c.b16 %v1139, %v1139
      %v1152 = vpack.c.b16 %v1140, %v1140
      %v1153 = vpack.c.b16 %v1141, %v1141
      %v1154 = vpack.c.b16 %v1142, %v1142
      %v1155 = vpack.c.b16 %v1143, %v1143
      %v1156 = vpack.c.b16 %v1144, %v1144
      %v1157 = vpack.c.b16 %v1145, %v1145
      %v1158 = vpack.c.b16 %v1146, %v1146
      %vm1171 = vcmask 60416
      %1172 = vst.msk [vmem:[%s255] sm:$0xf] %vm1171, %v1147
      %1173 = vst.msk [vmem:[%s255 + $0x4] sm:$0xf] %vm1171, %v1148
      %1174 = vst.msk [vmem:[%s255 + $0x8] sm:$0xf] %vm1171, %v1149
      %1175 = vst.msk [vmem:[%s255 + $0xc] sm:$0xf] %vm1171, %v1150
      %1176 = vst.msk [vmem:[%s255 + $0x10] sm:$0xf] %vm1171, %v1151
      %1177 = vst.msk [vmem:[%s255 + $0x14] sm:$0xf] %vm1171, %v1152
      %1178 = vst.msk [vmem:[%s255 + $0x18] sm:$0xf] %vm1171, %v1153
      %1179 = vst.msk [vmem:[%s255 + $0x1c] sm:$0xf] %vm1171, %v1154
      %1180 = vst.msk [vmem:[%s255 + $0x20] sm:$0xf] %vm1171, %v1155
      %1181 = vst.msk [vmem:[%s255 + $0x24] sm:$0xf] %vm1171, %v1156
      %1182 = vst.msk [vmem:[%s255 + $0x28] sm:$0xf] %vm1171, %v1157
      %1183 = vst.msk [vmem:[%s255 + $0x2c] sm:$0xf] %vm1171, %v1158
      %p1184 = scmp.lt.s32.totalorder %s20, 1
      %s1185 = scalar_select %p1184, %s20, 1
      %p1186 = scmp.lt.s32.totalorder %s21, 0
      %s1187 = scalar_select %p1186, %s21, 0
      %s1188 = smul.addr %s1185, 12
      %s1189 = sadd.s32 %s1187, %s1188
      %s1190 = smul.addr %s1189, 4
      %s1191 = scalar_lea.vmem %s5, %s1190
      // Predicated region
      $region41: #{swad_forward.1} parent=39 // pred_check
        %p1192 = pneg %p160
      $region42: #{swad_forward.1} parent=39 // pred_check_branch
        %1194 = sbr.rel (%p1192) target = $region44
      $region43: #{swad_forward.1} parent=39 // pred_region
        _
      $region44: #{swad_forward.1} parent=39 // pred_fallthru
        _
    $region40: #{swad_forward.1} parent=5 // pred_fallthru
      _
    %p1195 = scmp.le.s32.totalorder 2, %s11
    // Predicated region
    $region45: #{swad_forward.1} parent=5 // pred_check
      %p1196 = pneg %p1195
    $region46: #{swad_forward.1} parent=5 // pred_check_branch
      %1198 = sbr.rel (%p1196) target = $region48
    $region47: #{swad_forward.1} parent=5 // pred_region
      %s1199 = ssub.s32 %s11, 2
      // Predicated region
      $region49: #{swad_forward.1} parent=47 // pred_check
        %p1200 = pneg %p166
      $region50: #{swad_forward.1} parent=47 // pred_check_branch
        %1202 = sbr.rel (%p1200) target = $region52
      $region51: #{swad_forward.1} parent=47 // pred_region
        %p1203 = scmp.lt.s32.totalorder %s22, 1
        %s1204 = scalar_select %p1203, %s22, 1
        %p1205 = scmp.lt.s32.totalorder %s23, 0
        %s1206 = scalar_select %p1205, %s23, 0
        %s1207 = smul.addr %s1204, 12
        %s1208 = sadd.s32 %s1206, %s1207
        %s1209 = smul.addr %s1208, 4
        %s1210 = scalar_lea.vmem %s5, %s1209
      $region52: #{swad_forward.1} parent=47 // pred_fallthru
        _
    $region48: #{swad_forward.1} parent=5 // pred_fallthru
      _
  $region6: #{swad_forward.1} parent=0 // loop_footer
    %s15 = sadd.s32 1, %s11
  $region7: #{swad_forward.1} parent=0 // loop_footer_branch
    %10 = sbr.rel target = $region3
  $region8: #{swad_forward.1} parent=0 // loop_exit
    _

</llo_original>
